<compile_context>
chip_gen: v5e
topology: v5e:2x2
jax: 0.10.0
libtpu: 0.0.40
codegen_flags: <defaults>
</compile_context>

<pallas_src>
import functools

import jax
import jax.numpy as jnp
from jax.experimental import pallas as pl
from jax.experimental.pallas import tpu as pltpu


def _layernorm_kernel(x_ref, a_ref, b_ref, o_ref, *, eps: float, hidden: int):
    x = x_ref[...].astype(jnp.float32)          # (tile_rows, hidden)
    a = a_ref[...]                              # (1, hidden) f32 (pre-cast)
    b = b_ref[...]                              # (1, hidden) f32 (pre-cast)

    inv_h = 1.0 / hidden
    sum_x = jnp.sum(x, axis=-1, keepdims=True)          # (tile_rows, 1)
    sum_xx = jnp.sum(x * x, axis=-1, keepdims=True)     # (tile_rows, 1)
    mean = sum_x * inv_h
    # Unbiased variance: (sum(x^2) - H * mean^2) / (H - 1), guarded against
    # tiny negative values from floating-point cancellation.
    var = jnp.maximum((sum_xx - sum_x * mean) / (hidden - 1), 0.0)
    std = jnp.sqrt(var)
    # Per-row reciprocal (cheap, narrow) instead of an H-wide divide.
    inv = pl.reciprocal(std + eps, approx=False)         # (tile_rows, 1)
    out = a * ((x - mean) * inv) + b
    o_ref[...] = out.astype(o_ref.dtype)


def layer_norm(x: jax.Array, a_2: jax.Array, b_2: jax.Array,
               eps: float = 1e-6, tile_rows: int | None = None) -> jax.Array:
    """LayerNorm over the last axis of x (any leading shape)."""
    orig_shape = x.shape
    hidden = orig_shape[-1]
    rows = 1
    for d in orig_shape[:-1]:
        rows *= d
    x2 = x.reshape(rows, hidden)

    # Auto-size the row tile to ~4 MiB of input so the kernel is HBM-bound
    # rather than per-grid-step-overhead bound.  Double-buffered in + out at
    # this size is ~16 MiB, comfortably under the 48 MiB scoped limit below
    # on every generation (v7x: 64 MiB physical; v5e/v6e: 128 MiB).
    itemsize = jnp.dtype(x.dtype).itemsize
    if tile_rows is None:
        budget_bytes = 4 * 1024 * 1024
        tile_rows = max(budget_bytes // max(hidden * itemsize, 1), 16)
    if tile_rows >= rows:
        tile_rows = rows                      # single full-extent block
    else:
        # Multiple of 16 so bf16 inputs also satisfy (16, 128) sublane tiling.
        tile_rows = max((tile_rows // 16) * 16, 16)

    # No padding / slicing: let Pallas handle the ragged last block.  Rows are
    # independent, so garbage in the out-of-bounds tail cannot contaminate
    # valid rows, and OOB writes are discarded.
    grid = (pl.cdiv(rows, tile_rows),)

    a2 = a_2.reshape(1, hidden).astype(jnp.float32)
    b2 = b_2.reshape(1, hidden).astype(jnp.float32)

    kernel = functools.partial(_layernorm_kernel, eps=eps, hidden=hidden)

    out = pl.pallas_call(
        kernel,
        out_shape=jax.ShapeDtypeStruct((rows, hidden), x.dtype),
        grid_spec=pltpu.PrefetchScalarGridSpec(
            num_scalar_prefetch=0,
            grid=grid,
            in_specs=[
                pl.BlockSpec((tile_rows, hidden), lambda i: (i, 0)),
                pl.BlockSpec((1, hidden), lambda i: (0, 0)),
                pl.BlockSpec((1, hidden), lambda i: (0, 0)),
            ],
            out_specs=pl.BlockSpec((tile_rows, hidden), lambda i: (i, 0)),
        ),
        compiler_params=pltpu.CompilerParams(
            dimension_semantics=("parallel",),      # sharded across TCs on v7x
            vmem_limit_bytes=48 * 1024 * 1024,
        ),
    )(x2, a2, b2)

    return out.reshape(orig_shape)


if __name__ == "__main__":
    key = jax.random.PRNGKey(0)
    batch, seq, hidden = 2, 8, 32
    x = jax.random.normal(key, (batch, seq, hidden), dtype=jnp.float32)

    # Deterministic parameter init, matching the module's __init__:
    a_2 = jnp.ones((hidden,), dtype=jnp.float32)   # torch.ones(feature_size)
    b_2 = jnp.zeros((hidden,), dtype=jnp.float32)  # torch.zeros(feature_size)
    eps = 1e-6

    out = layer_norm(x, a_2, b_2, eps=eps)
    out = jax.block_until_ready(out)

    # Reference check (pure JAX, same unbiased-std + eps-on-std semantics).
    mean = jnp.mean(x, axis=-1, keepdims=True)
    std = jnp.sqrt(jnp.sum((x - mean) ** 2, axis=-1, keepdims=True) / (hidden - 1))
    ref = a_2 * (x - mean) / (std + eps) + b_2
    assert jnp.allclose(out, ref, atol=1e-5, rtol=1e-5), "mismatch vs reference"

    print("KERNEL_OK")
</pallas_src>

<mosaic_0001>
module attributes {stable_mosaic.version = 11 : i64} {
  func.func @_layernorm_kernel(%arg0: i32, %arg1: memref<16x32xf32, #tpu.memory_space<vmem>>, %arg2: memref<1x32xf32, #tpu.memory_space<vmem>>, %arg3: memref<1x32xf32, #tpu.memory_space<vmem>>, %arg4: memref<16x32xf32, #tpu.memory_space<vmem>>) attributes {dimension_semantics = [#tpu.dimension_semantics<parallel>], iteration_bounds = array<i64: 1>, scalar_prefetch = 0 : i64, scratch_operands = 0 : i64, tpu.core_type = #tpu.core_type<tc>, window_params = [{transform_indices = @transform_0, window_bounds = array<i64: 16, 32>}, {pipeline_mode = #tpu.pipeline_mode<synchronous>, transform_indices = @transform_1, window_bounds = array<i64: 1, 32>}, {pipeline_mode = #tpu.pipeline_mode<synchronous>, transform_indices = @transform_2, window_bounds = array<i64: 1, 32>}, {transform_indices = @transform_3, window_bounds = array<i64: 16, 32>}]} {
    %c0 = arith.constant 0 : index
    %c0_0 = arith.constant 0 : index
    %0 = vector.load %arg1[%c0, %c0_0] : memref<16x32xf32, #tpu.memory_space<vmem>>, vector<16x32xf32>
    %c0_1 = arith.constant 0 : index
    %c0_2 = arith.constant 0 : index
    %1 = vector.load %arg2[%c0_1, %c0_2] : memref<1x32xf32, #tpu.memory_space<vmem>>, vector<1x32xf32>
    %c0_3 = arith.constant 0 : index
    %c0_4 = arith.constant 0 : index
    %2 = vector.load %arg3[%c0_3, %c0_4] : memref<1x32xf32, #tpu.memory_space<vmem>>, vector<1x32xf32>
    %cst = arith.constant dense<0.000000e+00> : vector<16xf32>
    %3 = vector.multi_reduction <add>, %0, %cst [1] : vector<16x32xf32> to vector<16xf32>
    %4 = vector.shape_cast %3 : vector<16xf32> to vector<16x1xf32>
    %5 = arith.mulf %0, %0 : vector<16x32xf32>
    %cst_5 = arith.constant dense<0.000000e+00> : vector<16xf32>
    %6 = vector.multi_reduction <add>, %5, %cst_5 [1] : vector<16x32xf32> to vector<16xf32>
    %7 = vector.shape_cast %6 : vector<16xf32> to vector<16x1xf32>
    %cst_6 = arith.constant 3.125000e-02 : f32
    %8 = vector.broadcast %cst_6 : f32 to vector<16x1xf32>
    %9 = arith.mulf %4, %8 : vector<16x1xf32>
    %10 = arith.mulf %4, %9 : vector<16x1xf32>
    %11 = arith.subf %7, %10 : vector<16x1xf32>
    %cst_7 = arith.constant 3.100000e+01 : f32
    %12 = vector.broadcast %cst_7 : f32 to vector<16x1xf32>
    %13 = arith.divf %11, %12 : vector<16x1xf32>
    %cst_8 = arith.constant 0.000000e+00 : f32
    %14 = vector.broadcast %cst_8 : f32 to vector<16x1xf32>
    %15 = arith.maximumf %13, %14 : vector<16x1xf32>
    %16 = math.sqrt %15 : vector<16x1xf32>
    %cst_9 = arith.constant 9.99999997E-7 : f32
    %17 = vector.broadcast %cst_9 : f32 to vector<16x1xf32>
    %18 = arith.addf %16, %17 : vector<16x1xf32>
    %19 = tpu.reciprocal %18 : vector<16x1xf32> -> vector<16x1xf32>
    %20 = vector.broadcast %9 : vector<16x1xf32> to vector<16x32xf32>
    %21 = arith.subf %0, %20 : vector<16x32xf32>
    %22 = vector.broadcast %19 : vector<16x1xf32> to vector<16x32xf32>
    %23 = arith.mulf %21, %22 : vector<16x32xf32>
    %24 = vector.broadcast %1 : vector<1x32xf32> to vector<16x32xf32>
    %25 = arith.mulf %24, %23 : vector<16x32xf32>
    %26 = vector.broadcast %2 : vector<1x32xf32> to vector<16x32xf32>
    %27 = arith.addf %25, %26 : vector<16x32xf32>
    %c0_10 = arith.constant 0 : index
    %c0_11 = arith.constant 0 : index
    %28 = vector.load %arg4[%c0_10, %c0_11] : memref<16x32xf32, #tpu.memory_space<vmem>>, vector<16x32xf32>
    tpu.vector_store %arg4[%c0_10, %c0_11], %27 {strides = array<i32>} : memref<16x32xf32, #tpu.memory_space<vmem>>, vector<16x32xf32>,
    return
  }
  func.func @transform_0(%arg0: i32) -> (i32, i32) {
    %c0_i32 = arith.constant 0 : i32
    %c0_i32_0 = arith.constant 0 : i32
    return %arg0, %c0_i32 : i32, i32
  }
  func.func @transform_1(%arg0: i32) -> (i32, i32) {
    %c0_i32 = arith.constant 0 : i32
    %c0_i32_0 = arith.constant 0 : i32
    %c0_i32_1 = arith.constant 0 : i32
    return %c0_i32, %c0_i32_0 : i32, i32
  }
  func.func @transform_2(%arg0: i32) -> (i32, i32) {
    %c0_i32 = arith.constant 0 : i32
    %c0_i32_0 = arith.constant 0 : i32
    %c0_i32_1 = arith.constant 0 : i32
    return %c0_i32, %c0_i32_0 : i32, i32
  }
  func.func @transform_3(%arg0: i32) -> (i32, i32) {
    %c0_i32 = arith.constant 0 : i32
    %c0_i32_0 = arith.constant 0 : i32
    return %arg0, %c0_i32 : i32, i32
  }
}

</mosaic_0001>

<llo_original>
// kernel: tpu_custom_call.1
$region0: #{tpu_custom_call.1}
  #allocation0 [shape = 'u32[]', space=smem, size = 0x4, offset = 0x4, fixed_abs, tag = 'smem constant byte address 0x4 - core index']
  #allocation1 [shape = 'u32[72,128]{1,0:T(1,128)}', space=vmem, size = 0x9000, scoped, tag = 'internal scratch']
  %s0 = inlined_call_operand.hbm [shape: f32[16,32], index: 0, kind: input, shape index: {}]
  %s1 = inlined_call_operand.hbm [shape: f32[1,32], index: 1, kind: input, shape index: {}]
  %s2 = inlined_call_operand.vmem [shape: f32[1,32], index: 2, kind: input, shape index: {}]
  %s3 = inlined_call_operand.hbm [shape: f32[16,32], index: 3, kind: output, shape index: {}]
  %s4 = sld [smem:[#allocation0]]
  $region30: #{tpu_custom_call.1} parent=0
    _
  %s6 = ssub.s32 1, %s4
  %s7 = scalar_select 0, %s6, %s4
  $region1: #{tpu_custom_call.1} parent=0
    #allocation2 [shape = 'u8[8192]{0}', space=vmem, size = 0x2000, scoped, tag = 'input window, operand 0, single buffered']
    #allocation3 [shape = 's32[1]{0}', space=sflag, size = 0x4, scoped, tag = 'scoped memory for tpu_custom_call.1']
    #allocation4 [shape = 's32[1]{0}', space=sflag, size = 0x4, scoped, tag = 'scoped memory for tpu_custom_call.1']
    #allocation5 [shape = 'u8[512]{0}', space=vmem, size = 0x400, scoped, tag = 'input window, operand 1, single buffered']
    #allocation6 [shape = 's32[1]{0}', space=sflag, size = 0x4, scoped, tag = 'scoped memory for tpu_custom_call.1']
    #allocation7 [shape = 'u8[8192]{0}', space=vmem, size = 0x2000, scoped, tag = 'output window, operand 0, single buffered']
    %8 = vsyncpa [#allocation3], 0
    %9 = vsyncpa [#allocation6], 0
    %10 = vsyncpa [#allocation4], 0
    // Predicated region
    $region2: #{tpu_custom_call.1} parent=1 // pred_check
      _
    $region3: #{tpu_custom_call.1} parent=1 // pred_check_branch
      %12 = sbr.rel (0) target = $region5
    $region4: #{tpu_custom_call.1} parent=1 // pred_region
      %14 = vsyncadd [#allocation3], 0
      %s15 = sshll.u32 %s0, 4
      %s16 = int_to_ptr.hbm [resolvable:$true] %s15
      %s17 = sshll.u32 [#allocation2], 4
      %s18 = int_to_ptr.vmem [resolvable:$true] %s17
      %23 = dma.hbm_to_vmem [thread:$0]  %s16, 256, %s18, [#allocation3], 128, 128, 8
    $region5: #{tpu_custom_call.1} parent=1 // pred_fallthru
      _
    // Predicated region
    $region6: #{tpu_custom_call.1} parent=1 // pred_check
      _
    $region7: #{tpu_custom_call.1} parent=1 // pred_check_branch
      %25 = sbr.rel (0) target = $region9
    $region8: #{tpu_custom_call.1} parent=1 // pred_region
      %27 = vsyncadd [#allocation6], 0
      %s29 = sshll.u32 %s1, 4
      %s30 = int_to_ptr.hbm [resolvable:$true] %s29
      %s31 = sshll.u32 [#allocation5], 4
      %s32 = int_to_ptr.vmem [resolvable:$true] %s31
      %34 = dma.hbm_to_vmem [thread:$0]  %s30, 16, %s32, [#allocation6]
    $region9: #{tpu_custom_call.1} parent=1 // pred_fallthru
      _
    // Predicated region
    $region10: #{tpu_custom_call.1} parent=1 // pred_check
      _
    $region11: #{tpu_custom_call.1} parent=1 // pred_check_branch
      %36 = sbr.rel (0) target = $region13
    $region12: #{tpu_custom_call.1} parent=1 // pred_region
      _
    $region13: #{tpu_custom_call.1} parent=1 // pred_fallthru
      _
    // Predicated region
    $region14: #{tpu_custom_call.1} parent=1 // pred_check
      _
    $region15: #{tpu_custom_call.1} parent=1 // pred_check_branch
      %38 = sbr.rel (0) target = $region17
    $region16: #{tpu_custom_call.1} parent=1 // pred_region
      %40 = dma.done [#allocation3], 256
    $region17: #{tpu_custom_call.1} parent=1 // pred_fallthru
      _
    // Predicated region
    $region18: #{tpu_custom_call.1} parent=1 // pred_check
      _
    $region19: #{tpu_custom_call.1} parent=1 // pred_check_branch
      %42 = sbr.rel (0) target = $region21
    $region20: #{tpu_custom_call.1} parent=1 // pred_region
      %44 = dma.done [#allocation6], 16
    $region21: #{tpu_custom_call.1} parent=1 // pred_fallthru
      _
    %v45 = vld [vmem:[#allocation2] sm:$0xff]
    %v46 = vld [vmem:[#allocation2 + $0x8] sm:$0xff]
    %v47 = vld [vmem:[#allocation5] sm:$0x1]
    %v48 = vld [vmem:[%s2] sm:$0x1]
    %vm49 = vcmask 261120
    %v50 = vsel %vm49, %v45, 0.0
    %51 = vadd.xlane.f32.xlu0 %v50
    %v52 = vpop.xlane.xlu0 %51
    %v53 = vsel %vm49, %v46, 0.0
    %54 = vadd.xlane.f32.xlu0 %v53
    %v55 = vpop.xlane.xlu0 %54
    %v56 = vmul.f32 %v45, %v45
    %v57 = vmul.f32 %v46, %v46
    %v58 = vsel %vm49, %v56, 0.0
    %59 = vadd.xlane.f32.xlu0 %v58
    %v60 = vpop.xlane.xlu0 %59
    %v61 = vsel %vm49, %v57, 0.0
    %62 = vadd.xlane.f32.xlu0 %v61
    %v63 = vpop.xlane.xlu0 %62
    %v64 = vmul.f32 %v52, 0.03125
    %v65 = vmul.f32 %v55, 0.03125
    %v66 = vmul.f32 %v52, %v64
    %v67 = vmul.f32 %v55, %v65
    %v68 = vsub.f32 %v60, %v66
    %v69 = vsub.f32 %v63, %v67
    %v70 = vrcp.pop 31.0
    %v71 = vmul.f32 31.0, %v70
    %v72 = vsub.f32 1.0, %v71
    %v73 = vmul.f32 %v70, %v72
    %v74 = vadd.f32 %v70, %v73
    %vm75 = vweird.f32 %v70
    %v76 = vsel %vm75, %v70, %v74
    %v77 = vmul.f32 %v68, %v76
    %v78 = vmul.f32 %v69, %v76
    %v79 = vmax.f32 %v77, 0.0
    %v80 = vmax.f32 %v78, 0.0
    %v81 = vrsqrt.pop %v79
    %v82 = vmul.f32 %v81, %v79
    %v83 = vmul.f32 %v82, %v81
    %v84 = vmul.f32 0.5, %v83
    %v85 = vsub.f32 1.5, %v84
    %v86 = vmul.f32 %v81, %v85
    %v87 = vmul.f32 %v79, %v86
    %vm88 = vcmp.eq.f32.partialorder %v79, inf
    %v89 = vsel %vm88, %v79, %v87
    %vm90 = vcmp.eq.f32.partialorder %v79, 0.0
    %v91 = vand.u32 %v79, 2147483648
    %v92 = vsel %vm90, %v91, %v89
    %v93 = vrsqrt.pop %v80
    %v94 = vmul.f32 %v93, %v80
    %v95 = vmul.f32 %v94, %v93
    %v96 = vmul.f32 0.5, %v95
    %v97 = vsub.f32 1.5, %v96
    %v98 = vmul.f32 %v93, %v97
    %v99 = vmul.f32 %v80, %v98
    %vm100 = vcmp.eq.f32.partialorder %v80, inf
    %v101 = vsel %vm100, %v80, %v99
    %vm102 = vcmp.eq.f32.partialorder %v80, 0.0
    %v103 = vand.u32 %v80, 2147483648
    %v104 = vsel %vm102, %v103, %v101
    %v105 = vadd.f32 %v92, 1e-06
    %v106 = vadd.f32 %v104, 1e-06
    %v107 = vrcp.pop %v105
    %v108 = vmul.f32 %v105, %v107
    %v109 = vsub.f32 1.0, %v108
    %v110 = vmul.f32 %v107, %v109
    %v111 = vadd.f32 %v107, %v110
    %vm112 = vweird.f32 %v105
    %vm113 = vweird.f32 %v107
    %vm114 = vmor %vm112, %vm113
    %v115 = vsel %vm114, %v107, %v111
    %v116 = vand.u32 2147483647, %v105
    %vm117 = vcmp.eq.f32.partialorder %v116, 8.507059e+37
    %v118 = vand.u32 %v105, 2147483648
    %v119 = vor.u32 1.1754944e-38, %v118
    %v120 = vsel %vm117, %v119, %v115
    %v121 = vrcp.pop %v106
    %v122 = vmul.f32 %v106, %v121
    %v123 = vsub.f32 1.0, %v122
    %v124 = vmul.f32 %v121, %v123
    %v125 = vadd.f32 %v121, %v124
    %vm126 = vweird.f32 %v106
    %vm127 = vweird.f32 %v121
    %vm128 = vmor %vm126, %vm127
    %v129 = vsel %vm128, %v121, %v125
    %v130 = vand.u32 2147483647, %v106
    %vm131 = vcmp.eq.f32.partialorder %v130, 8.507059e+37
    %v132 = vand.u32 %v106, 2147483648
    %v133 = vor.u32 1.1754944e-38, %v132
    %v134 = vsel %vm131, %v133, %v129
    %v135 = vsub.f32 %v45, %v64
    %v136 = vsub.f32 %v46, %v65
    %v137 = vmul.f32 %v135, %v120
    %v138 = vmul.f32 %v136, %v134
    %v140 = vperm.slane %v47, 0
    %v142 = vmul.f32 %v140, %v137
    %v143 = vmul.f32 %v140, %v138
    %v145 = vperm.slane %v48, 0
    %v147 = vadd.f32 %v142, %v145
    %v148 = vadd.f32 %v143, %v145
    %149 = vst.msk [vmem:[#allocation7] sm:$0xff] %vm49, %v147
    %150 = vst.msk [vmem:[#allocation7 + $0x8] sm:$0xff] %vm49, %v148
    // Predicated region
    $region22: #{tpu_custom_call.1} parent=1 // pred_check
      _
    $region23: #{tpu_custom_call.1} parent=1 // pred_check_branch
      %152 = sbr.rel (0) target = $region25
    $region24: #{tpu_custom_call.1} parent=1 // pred_region
      %154 = vsyncadd [#allocation4], 0
      %s155 = sshll.u32 [#allocation7], 4
      %s156 = int_to_ptr.vmem [resolvable:$true] %s155
      %s157 = sshll.u32 %s3, 4
      %s158 = int_to_ptr.hbm [resolvable:$true] %s157
      %163 = dma.vmem_to_hbm [thread:$0]  %s156, 256, %s158, [#allocation4], 128, 128, 8
    $region25: #{tpu_custom_call.1} parent=1 // pred_fallthru
      _
    // Predicated region
    $region26: #{tpu_custom_call.1} parent=1 // pred_check
      _
    $region27: #{tpu_custom_call.1} parent=1 // pred_check_branch
      %165 = sbr.rel (0) target = $region29
    $region28: #{tpu_custom_call.1} parent=1 // pred_region
      %167 = dma.done [#allocation4], 256
    $region29: #{tpu_custom_call.1} parent=1 // pred_fallthru
      _
    %168 = vsyncpa [#allocation3], 1
    %169 = vsyncpa [#allocation6], 1
    %170 = vsyncpa [#allocation4], 1

</llo_original>
